<compile_context>
chip_gen: v5e
topology: v5e:2x2
jax: 0.10.0
libtpu: 0.0.40
codegen_flags: <defaults>
</compile_context>

<pallas_src>
import functools

import jax
import jax.numpy as jnp
from jax import lax
from jax.experimental import pallas as pl
from jax.experimental.pallas import tpu as pltpu


def _flash_self_attn_kernel(xr_ref, xc_ref, wq_ref, wk_ref, wv_ref, o_ref,
                            m_sc, l_sc, acc_sc, k_sc,
                            *, compute_dtype, approx_recip):
    """Grid = (key-row tiles [parallel], query/value tiles [reduction]).

    NB: the PyTorch module computes attn_scores = keys @ query.T and softmaxes
    over dim=-1, i.e. it normalizes over the *query* index. So output rows
    track key tiles and the online-softmax reduction walks query/value tiles.
    Nonstandard attention, but it matches the module exactly.
    """
    c = pl.program_id(1)

    @pl.when(c == 0)
    def _init():
        m_sc[...] = jnp.full_like(m_sc, -jnp.inf)
        l_sc[...] = jnp.zeros_like(l_sc)
        acc_sc[...] = jnp.zeros_like(acc_sc)
        # Row-tile keys: computed once per row tile, kept resident across the
        # reduction axis. The 1/sqrt(d_out) softmax scale is folded in here
        # (tr x d_out elements) rather than scaling the (tr, tc) score tile on
        # every reduction step.
        k = jnp.dot(xr_ref[...].astype(compute_dtype),
                    wk_ref[...].astype(compute_dtype),
                    preferred_element_type=jnp.float32)
        scale = 1.0 / jnp.sqrt(jnp.float32(k.shape[-1]))
        k_sc[...] = (k * scale).astype(k_sc.dtype)

    # Column-tile query / value projections (weights stay VMEM-resident via
    # their constant index_maps). With d_out >= 128 these could be fused into a
    # single x @ [Wq|Wv] matmul; at d_out=16 the slices would force VMEM copies.
    xc = xc_ref[...].astype(compute_dtype)
    q = jnp.dot(xc, wq_ref[...].astype(compute_dtype),
                preferred_element_type=jnp.float32)
    v = jnp.dot(xc, wv_ref[...].astype(compute_dtype),
                preferred_element_type=jnp.float32)

    # (tr, tc) score tile: keys @ query.T via dot_general (contract trailing
    # axes; no explicit transpose). MXU operands in compute_dtype, f32 accum.
    s = lax.dot_general(
        k_sc[...].astype(compute_dtype), q.astype(compute_dtype),
        dimension_numbers=(((1,), (1,)), ((), ())),
        preferred_element_type=jnp.float32)

    # Online softmax — all softmax math stays f32.
    m_prev = m_sc[...]
    m_new = jnp.maximum(m_prev, s.max(axis=-1, keepdims=True))
    alpha = jnp.exp(m_prev - m_new)
    p = jnp.exp(s - m_new)
    l_sc[...] = alpha * l_sc[...] + p.sum(axis=-1, keepdims=True)
    acc_sc[...] = alpha * acc_sc[...] + jnp.dot(
        p.astype(compute_dtype), v.astype(compute_dtype),
        preferred_element_type=jnp.float32)
    m_sc[...] = m_new

    @pl.when(c == pl.num_programs(1) - 1)
    def _finalize():
        # EUP approximate reciprocal instead of an exact divide on the VALU path.
        inv_l = pl.reciprocal(l_sc[...], approx=approx_recip)
        o_ref[...] = (acc_sc[...] * inv_l).astype(o_ref.dtype)


def _pick_tile(n, target):
    """Largest divisor of n that is <= target (n itself when n <= target)."""
    t = min(n, target)
    while n % t != 0:
        t -= 1
    return t


def self_attention_v1(x, w_query, w_key, w_value, *,
                      block_r=128, block_c=128,
                      compute_dtype=None, approx_reciprocal=True):
    """SelfAttention_v1.forward as a fused, tiled Pallas TPU kernel.

    x: (seq, d_in); W_*: (d_in, d_out); returns (seq, d_out).
    compute_dtype: MXU operand dtype (e.g. jnp.bfloat16 on v6e/v7x); softmax
    math and matmul accumulation stay f32. Defaults to x.dtype.
    """
    seq, d_in = x.shape
    d_out = w_query.shape[1]
    if compute_dtype is None:
        compute_dtype = x.dtype

    tr = _pick_tile(seq, block_r)   # key/row tile     -> "parallel" grid axis
    tc = _pick_tile(seq, block_c)   # query/value tile -> trailing reduction axis
    grid = (seq // tr, seq // tc)

    kernel = functools.partial(_flash_self_attn_kernel,
                               compute_dtype=compute_dtype,
                               approx_recip=approx_reciprocal)

    return pl.pallas_call(
        kernel,
        out_shape=jax.ShapeDtypeStruct((seq, d_out), x.dtype),
        grid=grid,
        in_specs=[
            # x, row view (keys): block follows the key/row grid index (held
            # across the reduction axis -> fetched once per row tile).
            pl.BlockSpec((tr, d_in), lambda r, c: (r, 0)),
            # x, column view (query/value): block follows the reduction index.
            pl.BlockSpec((tc, d_in), lambda r, c: (c, 0)),
            # Weights: constant index_map -> fetched once, VMEM-resident.
            pl.BlockSpec((d_in, d_out), lambda r, c: (0, 0)),
            pl.BlockSpec((d_in, d_out), lambda r, c: (0, 0)),
            pl.BlockSpec((d_in, d_out), lambda r, c: (0, 0)),
        ],
        # Same output block across the reduction axis -> VMEM-resident
        # accumulator, written once at the last reduction step (P3 pattern).
        out_specs=pl.BlockSpec((tr, d_out), lambda r, c: (r, 0)),
        scratch_shapes=[
            pltpu.VMEM((tr, 1), jnp.float32),        # running max   m
            pltpu.VMEM((tr, 1), jnp.float32),        # running denom l
            pltpu.VMEM((tr, d_out), jnp.float32),    # f32 output accumulator
            pltpu.VMEM((tr, d_out), compute_dtype),  # cached pre-scaled key tile
        ],
        compiler_params=pltpu.CompilerParams(
            # Row/key axis is embarrassingly parallel (lets v7x use its 2nd TC);
            # the reduction axis must stay "arbitrary".
            dimension_semantics=("parallel", "arbitrary"),
        ),
    )(x, x, w_query, w_key, w_value)


def _reference(x, w_query, w_key, w_value):
    keys = x @ w_key
    query = x @ w_query
    values = x @ w_value
    attn_scores = keys @ query.T
    attn_weights = jax.nn.softmax(
        attn_scores / jnp.sqrt(jnp.float32(keys.shape[-1])), axis=-1)
    return attn_weights @ values


if __name__ == "__main__":
    # Module __init__: W_* are (d_in, d_out); forward implies x is (seq, d_in).
    seq, d_in, d_out = 8, 32, 16

    key = jax.random.PRNGKey(0)
    kx, kq, kk, kv = jax.random.split(key, 4)
    x = jax.random.normal(kx, (seq, d_in), dtype=jnp.float32)
    w_query = jax.random.normal(kq, (d_in, d_out), dtype=jnp.float32)
    w_key = jax.random.normal(kk, (d_in, d_out), dtype=jnp.float32)
    w_value = jax.random.normal(kv, (d_in, d_out), dtype=jnp.float32)

    ref = _reference(x, w_query, w_key, w_value)

    # 1) Exact-reciprocal f32 path: tight correctness check vs the reference.
    out_exact = jax.block_until_ready(
        self_attention_v1(x, w_query, w_key, w_value, approx_reciprocal=False))
    assert out_exact.shape == (seq, d_out)
    assert jnp.allclose(out_exact, ref, atol=1e-4, rtol=1e-4)

    # 2) Default (perf) path: EUP approx reciprocal for the softmax denominator.
    out = jax.block_until_ready(self_attention_v1(x, w_query, w_key, w_value))
    assert out.shape == (seq, d_out)
    assert jnp.allclose(out, ref, atol=2e-2, rtol=2e-2)

    # 3) Multi-tile grid (exercises the online-softmax reduction across several
    #    query/value tiles plus several parallel row tiles).
    seq2 = 256
    kx2 = jax.random.split(key, 5)[4]
    x2 = jax.random.normal(kx2, (seq2, d_in), dtype=jnp.float32)
    ref2 = _reference(x2, w_query, w_key, w_value)
    out2 = jax.block_until_ready(
        self_attention_v1(x2, w_query, w_key, w_value,
                          block_r=128, block_c=64, approx_reciprocal=False))
    assert out2.shape == (seq2, d_out)
    assert jnp.allclose(out2, ref2, atol=1e-3, rtol=1e-3)

    # 4) bf16 MXU-operand path (v6e/v7x recommendation): exercise the lowering.
    #    (bf16 scores shift the near-one-hot softmax, so only a sanity check.)
    out_bf16 = jax.block_until_ready(
        self_attention_v1(x, w_query, w_key, w_value,
                          compute_dtype=jnp.bfloat16))
    assert out_bf16.shape == (seq, d_out)
    assert bool(jnp.all(jnp.isfinite(out_bf16.astype(jnp.float32))))

    print("KERNEL_OK")
</pallas_src>

<mosaic_0001>
module attributes {stable_mosaic.version = 11 : i64} {
  func.func @_flash_self_attn_kernel(%arg0: i32, %arg1: i32, %arg2: memref<8x32xf32, #tpu.memory_space<vmem>>, %arg3: memref<8x32xf32, #tpu.memory_space<vmem>>, %arg4: memref<32x16xf32, #tpu.memory_space<vmem>>, %arg5: memref<32x16xf32, #tpu.memory_space<vmem>>, %arg6: memref<32x16xf32, #tpu.memory_space<vmem>>, %arg7: memref<8x16xf32, #tpu.memory_space<vmem>>, %arg8: memref<8x1xf32, #tpu.memory_space<vmem>>, %arg9: memref<8x1xf32, #tpu.memory_space<vmem>>, %arg10: memref<8x16xf32, #tpu.memory_space<vmem>>, %arg11: memref<8x16xf32, #tpu.memory_space<vmem>>) attributes {dimension_semantics = [#tpu.dimension_semantics<parallel>, #tpu.dimension_semantics<arbitrary>], iteration_bounds = array<i64: 1, 1>, scalar_prefetch = 0 : i64, scratch_operands = 4 : i64, tpu.core_type = #tpu.core_type<tc>, window_params = [{transform_indices = @transform_0, window_bounds = array<i64: 8, 32>}, {transform_indices = @transform_1, window_bounds = array<i64: 8, 32>}, {pipeline_mode = #tpu.pipeline_mode<synchronous>, transform_indices = @transform_2, window_bounds = array<i64: 32, 16>}, {pipeline_mode = #tpu.pipeline_mode<synchronous>, transform_indices = @transform_3, window_bounds = array<i64: 32, 16>}, {pipeline_mode = #tpu.pipeline_mode<synchronous>, transform_indices = @transform_4, window_bounds = array<i64: 32, 16>}, {transform_indices = @transform_5, window_bounds = array<i64: 8, 16>}]} {
    %c0_i32 = arith.constant 0 : i32
    %0 = arith.cmpi eq, %arg1, %c0_i32 : i32
    %1 = arith.extui %0 : i1 to i32
    %c0_i32_0 = arith.constant 0 : i32
    %2 = arith.cmpi ne, %1, %c0_i32_0 : i32
    scf.if %2 {
      %cst_27 = arith.constant 0xFF800000 : f32
      %35 = vector.broadcast %cst_27 : f32 to vector<8x1xf32>
      %c0_28 = arith.constant 0 : index
      %c0_29 = arith.constant 0 : index
      %36 = vector.load %arg8[%c0_28, %c0_29] : memref<8x1xf32, #tpu.memory_space<vmem>>, vector<8x1xf32>
      tpu.vector_store %arg8[%c0_28, %c0_29], %35 {strides = array<i32>} : memref<8x1xf32, #tpu.memory_space<vmem>>, vector<8x1xf32>,
      %cst_30 = arith.constant 0.000000e+00 : f32
      %37 = vector.broadcast %cst_30 : f32 to vector<8x1xf32>
      %c0_31 = arith.constant 0 : index
      %c0_32 = arith.constant 0 : index
      %38 = vector.load %arg9[%c0_31, %c0_32] : memref<8x1xf32, #tpu.memory_space<vmem>>, vector<8x1xf32>
      tpu.vector_store %arg9[%c0_31, %c0_32], %37 {strides = array<i32>} : memref<8x1xf32, #tpu.memory_space<vmem>>, vector<8x1xf32>,
      %cst_33 = arith.constant 0.000000e+00 : f32
      %39 = vector.broadcast %cst_33 : f32 to vector<8x16xf32>
      %c0_34 = arith.constant 0 : index
      %c0_35 = arith.constant 0 : index
      %40 = vector.load %arg10[%c0_34, %c0_35] : memref<8x16xf32, #tpu.memory_space<vmem>>, vector<8x16xf32>
      tpu.vector_store %arg10[%c0_34, %c0_35], %39 {strides = array<i32>} : memref<8x16xf32, #tpu.memory_space<vmem>>, vector<8x16xf32>,
      %c0_36 = arith.constant 0 : index
      %c0_37 = arith.constant 0 : index
      %41 = vector.load %arg2[%c0_36, %c0_37] : memref<8x32xf32, #tpu.memory_space<vmem>>, vector<8x32xf32>
      %c0_38 = arith.constant 0 : index
      %c0_39 = arith.constant 0 : index
      %42 = vector.load %arg5[%c0_38, %c0_39] : memref<32x16xf32, #tpu.memory_space<vmem>>, vector<32x16xf32>
      %cst_40 = arith.constant dense<0.000000e+00> : vector<8x16xf32>
      %43 = tpu.matmul %41, %42, %cst_40 {dimension_numbers = #tpu.dot_dimension_numbers<[1], [0], [0], [1], [0, 0, 1, 1], [], []>} : vector<8x32xf32>, vector<32x16xf32>, vector<8x16xf32> -> vector<8x16xf32>
      %cst_41 = arith.constant 1.600000e+01 : f32
      %44 = math.sqrt %cst_41 : f32
      %cst_42 = arith.constant 1.000000e+00 : f32
      %45 = arith.divf %cst_42, %44 : f32
      %46 = vector.broadcast %45 : f32 to vector<8x16xf32>
      %47 = arith.mulf %43, %46 : vector<8x16xf32>
      %c0_43 = arith.constant 0 : index
      %c0_44 = arith.constant 0 : index
      %48 = vector.load %arg11[%c0_43, %c0_44] : memref<8x16xf32, #tpu.memory_space<vmem>>, vector<8x16xf32>
      tpu.vector_store %arg11[%c0_43, %c0_44], %47 {strides = array<i32>} : memref<8x16xf32, #tpu.memory_space<vmem>>, vector<8x16xf32>,
    } else {
    }
    %c0 = arith.constant 0 : index
    %c0_1 = arith.constant 0 : index
    %3 = vector.load %arg3[%c0, %c0_1] : memref<8x32xf32, #tpu.memory_space<vmem>>, vector<8x32xf32>
    %c0_2 = arith.constant 0 : index
    %c0_3 = arith.constant 0 : index
    %4 = vector.load %arg4[%c0_2, %c0_3] : memref<32x16xf32, #tpu.memory_space<vmem>>, vector<32x16xf32>
    %cst = arith.constant dense<0.000000e+00> : vector<8x16xf32>
    %5 = tpu.matmul %3, %4, %cst {dimension_numbers = #tpu.dot_dimension_numbers<[1], [0], [0], [1], [0, 0, 1, 1], [], []>} : vector<8x32xf32>, vector<32x16xf32>, vector<8x16xf32> -> vector<8x16xf32>
    %c0_4 = arith.constant 0 : index
    %c0_5 = arith.constant 0 : index
    %6 = vector.load %arg6[%c0_4, %c0_5] : memref<32x16xf32, #tpu.memory_space<vmem>>, vector<32x16xf32>
    %cst_6 = arith.constant dense<0.000000e+00> : vector<8x16xf32>
    %7 = tpu.matmul %3, %6, %cst_6 {dimension_numbers = #tpu.dot_dimension_numbers<[1], [0], [0], [1], [0, 0, 1, 1], [], []>} : vector<8x32xf32>, vector<32x16xf32>, vector<8x16xf32> -> vector<8x16xf32>
    %c0_7 = arith.constant 0 : index
    %c0_8 = arith.constant 0 : index
    %8 = vector.load %arg11[%c0_7, %c0_8] : memref<8x16xf32, #tpu.memory_space<vmem>>, vector<8x16xf32>
    %cst_9 = arith.constant dense<0.000000e+00> : vector<8x8xf32>
    %9 = tpu.matmul %8, %5, %cst_9 {dimension_numbers = #tpu.dot_dimension_numbers<[1], [1], [0], [0], [0, 0, 1, 0], [], []>} : vector<8x16xf32>, vector<8x16xf32>, vector<8x8xf32> -> vector<8x8xf32>
    %c0_10 = arith.constant 0 : index
    %c0_11 = arith.constant 0 : index
    %10 = vector.load %arg8[%c0_10, %c0_11] : memref<8x1xf32, #tpu.memory_space<vmem>>, vector<8x1xf32>
    %cst_12 = arith.constant dense<0xFF800000> : vector<8xf32>
    %11 = vector.multi_reduction <maximumf>, %9, %cst_12 [1] : vector<8x8xf32> to vector<8xf32>
    %12 = vector.shape_cast %11 : vector<8xf32> to vector<8x1xf32>
    %13 = arith.maximumf %10, %12 : vector<8x1xf32>
    %14 = arith.subf %10, %13 : vector<8x1xf32>
    %15 = math.exp %14 : vector<8x1xf32>
    %16 = vector.broadcast %13 : vector<8x1xf32> to vector<8x8xf32>
    %17 = arith.subf %9, %16 : vector<8x8xf32>
    %18 = math.exp %17 : vector<8x8xf32>
    %c0_13 = arith.constant 0 : index
    %c0_14 = arith.constant 0 : index
    %19 = vector.load %arg9[%c0_13, %c0_14] : memref<8x1xf32, #tpu.memory_space<vmem>>, vector<8x1xf32>
    %20 = arith.mulf %15, %19 : vector<8x1xf32>
    %cst_15 = arith.constant dense<0.000000e+00> : vector<8xf32>
    %21 = vector.multi_reduction <add>, %18, %cst_15 [1] : vector<8x8xf32> to vector<8xf32>
    %22 = vector.shape_cast %21 : vector<8xf32> to vector<8x1xf32>
    %23 = arith.addf %20, %22 : vector<8x1xf32>
    %c0_16 = arith.constant 0 : index
    %c0_17 = arith.constant 0 : index
    %24 = vector.load %arg9[%c0_16, %c0_17] : memref<8x1xf32, #tpu.memory_space<vmem>>, vector<8x1xf32>
    tpu.vector_store %arg9[%c0_16, %c0_17], %23 {strides = array<i32>} : memref<8x1xf32, #tpu.memory_space<vmem>>, vector<8x1xf32>,
    %c0_18 = arith.constant 0 : index
    %c0_19 = arith.constant 0 : index
    %25 = vector.load %arg10[%c0_18, %c0_19] : memref<8x16xf32, #tpu.memory_space<vmem>>, vector<8x16xf32>
    %26 = vector.broadcast %15 : vector<8x1xf32> to vector<8x16xf32>
    %27 = arith.mulf %26, %25 : vector<8x16xf32>
    %cst_20 = arith.constant dense<0.000000e+00> : vector<8x16xf32>
    %28 = tpu.matmul %18, %7, %cst_20 {dimension_numbers = #tpu.dot_dimension_numbers<[1], [0], [0], [1], [0, 0, 1, 1], [], []>} : vector<8x8xf32>, vector<8x16xf32>, vector<8x16xf32> -> vector<8x16xf32>
    %29 = arith.addf %27, %28 : vector<8x16xf32>
    %c0_21 = arith.constant 0 : index
    %c0_22 = arith.constant 0 : index
    %30 = vector.load %arg10[%c0_21, %c0_22] : memref<8x16xf32, #tpu.memory_space<vmem>>, vector<8x16xf32>
    tpu.vector_store %arg10[%c0_21, %c0_22], %29 {strides = array<i32>} : memref<8x16xf32, #tpu.memory_space<vmem>>, vector<8x16xf32>,
    %c0_23 = arith.constant 0 : index
    %c0_24 = arith.constant 0 : index
    %31 = vector.load %arg8[%c0_23, %c0_24] : memref<8x1xf32, #tpu.memory_space<vmem>>, vector<8x1xf32>
    tpu.vector_store %arg8[%c0_23, %c0_24], %13 {strides = array<i32>} : memref<8x1xf32, #tpu.memory_space<vmem>>, vector<8x1xf32>,
    %c0_i32_25 = arith.constant 0 : i32
    %32 = arith.cmpi eq, %arg1, %c0_i32_25 : i32
    %33 = arith.extui %32 : i1 to i32
    %c0_i32_26 = arith.constant 0 : i32
    %34 = arith.cmpi ne, %33, %c0_i32_26 : i32
    scf.if %34 {
      %c0_27 = arith.constant 0 : index
      %c0_28 = arith.constant 0 : index
      %35 = vector.load %arg9[%c0_27, %c0_28] : memref<8x1xf32, #tpu.memory_space<vmem>>, vector<8x1xf32>
      %36 = tpu.reciprocal %35 : vector<8x1xf32> -> vector<8x1xf32>
      %c0_29 = arith.constant 0 : index
      %c0_30 = arith.constant 0 : index
      %37 = vector.load %arg10[%c0_29, %c0_30] : memref<8x16xf32, #tpu.memory_space<vmem>>, vector<8x16xf32>
      %38 = vector.broadcast %36 : vector<8x1xf32> to vector<8x16xf32>
      %39 = arith.mulf %37, %38 : vector<8x16xf32>
      %c0_31 = arith.constant 0 : index
      %c0_32 = arith.constant 0 : index
      %40 = vector.load %arg7[%c0_31, %c0_32] : memref<8x16xf32, #tpu.memory_space<vmem>>, vector<8x16xf32>
      tpu.vector_store %arg7[%c0_31, %c0_32], %39 {strides = array<i32>} : memref<8x16xf32, #tpu.memory_space<vmem>>, vector<8x16xf32>,
    } else {
    }
    return
  }
  func.func @transform_0(%arg0: i32, %arg1: i32) -> (i32, i32) {
    %c0_i32 = arith.constant 0 : i32
    %c0_i32_0 = arith.constant 0 : i32
    return %arg0, %c0_i32 : i32, i32
  }
  func.func @transform_1(%arg0: i32, %arg1: i32) -> (i32, i32) {
    %c0_i32 = arith.constant 0 : i32
    %c0_i32_0 = arith.constant 0 : i32
    return %arg1, %c0_i32 : i32, i32
  }
  func.func @transform_2(%arg0: i32, %arg1: i32) -> (i32, i32) {
    %c0_i32 = arith.constant 0 : i32
    %c0_i32_0 = arith.constant 0 : i32
    %c0_i32_1 = arith.constant 0 : i32
    return %c0_i32, %c0_i32_0 : i32, i32
  }
  func.func @transform_3(%arg0: i32, %arg1: i32) -> (i32, i32) {
    %c0_i32 = arith.constant 0 : i32
    %c0_i32_0 = arith.constant 0 : i32
    %c0_i32_1 = arith.constant 0 : i32
    return %c0_i32, %c0_i32_0 : i32, i32
  }
  func.func @transform_4(%arg0: i32, %arg1: i32) -> (i32, i32) {
    %c0_i32 = arith.constant 0 : i32
    %c0_i32_0 = arith.constant 0 : i32
    %c0_i32_1 = arith.constant 0 : i32
    return %c0_i32, %c0_i32_0 : i32, i32
  }
  func.func @transform_5(%arg0: i32, %arg1: i32) -> (i32, i32) {
    %c0_i32 = arith.constant 0 : i32
    %c0_i32_0 = arith.constant 0 : i32
    return %arg0, %c0_i32 : i32, i32
  }
}

</mosaic_0001>

<llo_original>
// kernel: tpu_custom_call.1
$region0: #{tpu_custom_call.1}
  #allocation0 [shape = 'u32[]', space=smem, size = 0x4, offset = 0x4, fixed_abs, tag = 'smem constant byte address 0x4 - core index']
  #allocation1 [shape = 'u32[72,128]{1,0:T(1,128)}', space=vmem, size = 0x9000, scoped, tag = 'internal scratch']
  #allocation2 [shape = 'f32[8,1]{1,0:T(8,128)}', space=vmem, size = 0x1000, scoped, tag = 'scratch operand']
  #allocation3 [shape = 'f32[8,1]{1,0:T(8,128)}', space=vmem, size = 0x1000, scoped, tag = 'scratch operand']
  #allocation4 [shape = 'f32[8,16]{1,0:T(8,128)}', space=vmem, size = 0x1000, scoped, tag = 'scratch operand']
  #allocation5 [shape = 'f32[8,16]{1,0:T(8,128)}', space=vmem, size = 0x1000, scoped, tag = 'scratch operand']
  %s0 = inlined_call_operand.vmem [shape: f32[8,32], index: 0, kind: input, shape index: {}]
  %s1 = inlined_call_operand.vmem [shape: f32[8,32], index: 1, kind: input, shape index: {}]
  %s2 = inlined_call_operand.vmem [shape: f32[32,16], index: 2, kind: input, shape index: {}]
  %s3 = inlined_call_operand.vmem [shape: f32[32,16], index: 3, kind: input, shape index: {}]
  %s4 = inlined_call_operand.vmem [shape: f32[32,16], index: 4, kind: input, shape index: {}]
  %s5 = inlined_call_operand.hbm [shape: f32[8,16], index: 5, kind: output, shape index: {}]
  %s6 = sld [smem:[#allocation0]]
  $region38: #{tpu_custom_call.1} parent=0
    _
  %s8 = ssub.s32 1, %s6
  %s9 = scalar_select 0, %s8, %s6
  $region1: #{tpu_custom_call.1} parent=0
    #allocation6 [shape = 'u8[4096]{0}', space=vmem, size = 0x1000, scoped, tag = 'output window, operand 0, single buffered']
    #allocation7 [shape = 's32[1]{0}', space=sflag, size = 0x4, scoped, tag = 'scoped memory for tpu_custom_call.1']
    %10 = vsyncpa [#allocation7], 0
    // Predicated region
    $region2: #{tpu_custom_call.1} parent=1 // pred_check
      _
    $region3: #{tpu_custom_call.1} parent=1 // pred_check_branch
      %12 = sbr.rel (0) target = $region5
    $region4: #{tpu_custom_call.1} parent=1 // pred_region
      _
    $region5: #{tpu_custom_call.1} parent=1 // pred_fallthru
      _
    // Predicated region
    $region6: #{tpu_custom_call.1} parent=1 // pred_check
      _
    $region7: #{tpu_custom_call.1} parent=1 // pred_check_branch
      %14 = sbr.rel (0) target = $region9
    $region8: #{tpu_custom_call.1} parent=1 // pred_region
      _
    $region9: #{tpu_custom_call.1} parent=1 // pred_fallthru
      _
    // Predicated region
    $region10: #{tpu_custom_call.1} parent=1 // pred_check
      _
    $region11: #{tpu_custom_call.1} parent=1 // pred_check_branch
      %16 = sbr.rel (0) target = $region13
    $region12: #{tpu_custom_call.1} parent=1 // pred_region
      _
    $region13: #{tpu_custom_call.1} parent=1 // pred_fallthru
      _
    // Predicated region
    $region14: #{tpu_custom_call.1} parent=1 // pred_check
      _
    $region15: #{tpu_custom_call.1} parent=1 // pred_check_branch
      %18 = sbr.rel (0) target = $region17
    $region16: #{tpu_custom_call.1} parent=1 // pred_region
      _
    $region17: #{tpu_custom_call.1} parent=1 // pred_fallthru
      _
    // Predicated region
    $region18: #{tpu_custom_call.1} parent=1 // pred_check
      _
    $region19: #{tpu_custom_call.1} parent=1 // pred_check_branch
      %20 = sbr.rel (0) target = $region21
    $region20: #{tpu_custom_call.1} parent=1 // pred_region
      _
    $region21: #{tpu_custom_call.1} parent=1 // pred_fallthru
      _
    %p21 = scmp.eq.s32.totalorder 0, 0
    // Predicated region
    $region22: #{tpu_custom_call.1} parent=1 // pred_check
      %p22 = pneg %p21
    $region23: #{tpu_custom_call.1} parent=1 // pred_check_branch
      %24 = sbr.rel (%p22) target = $region25
    $region24: #{tpu_custom_call.1} parent=1 // pred_region
      %vm25 = vcmask 7168
      %26 = vst.msk [vmem:[#allocation2] sm:$0xff] %vm25, -inf
      %27 = vst.msk [vmem:[#allocation3] sm:$0xff] %vm25, 0.0
      %vm28 = vcmask 130048
      %29 = vst.msk [vmem:[#allocation4] sm:$0xff] %vm28, 0.0
      %v30 = vld [vmem:[%s0] sm:$0xff]
      %v31 = vld [vmem:[%s3] sm:$0xff]
      %v32 = vld [vmem:[%s3 + $0x8] sm:$0xff]
      %v33 = vld [vmem:[%s3 + $0x10] sm:$0xff]
      %v34 = vld [vmem:[%s3 + $0x18] sm:$0xff]
      %vm35 = vcmask 261120
      %v37 = vsel %vm35, %v30, 0
      %39 = vmatpush.msra.mxu0 0.0
      %40 = vmatpush.msra.mxu0 0.0
      %41 = vmatpush.msra.mxu0 0.0
      %42 = vmatpush.msra.mxu0 0.0
      %43 = vmatpush.msra.mxu0 0.0
      %44 = vmatpush.msra.mxu0 0.0
      %45 = vmatpush.msra.mxu0 0.0
      %46 = vmatpush.msra.mxu0 0.0
      %47 = vmatpush.msra.mxu0 0.0
      %48 = vmatpush.msra.mxu0 0.0
      %49 = vmatpush.msra.mxu0 0.0
      %50 = vmatpush.msra.mxu0 0.0
      %51 = vmatpush.msra.mxu0 %v34
      %52 = vmatpush.msra.mxu0 %v33
      %53 = vmatpush.msra.mxu0 %v32
      %54 = vmatpush.msra.mxu0 %v31
      %55 = vmatmul.f32.gmra.mxu0 %v37
      %v56 = vpop.f32.mrf.mxu0
      %v57 = vadd.f32 0.0, %v56
      %58 = vdwg.mxu0
      %v59 = vmul.f32 %v57, 0.25
      %60 = vst.msk [vmem:[#allocation5] sm:$0xff] %vm28, %v59
    $region25: #{tpu_custom_call.1} parent=1 // pred_fallthru
      _
    %v61 = vld [vmem:[%s1] sm:$0xff]
    %v62 = vld [vmem:[%s2] sm:$0xff]
    %v63 = vld [vmem:[%s2 + $0x8] sm:$0xff]
    %v64 = vld [vmem:[%s2 + $0x10] sm:$0xff]
    %v65 = vld [vmem:[%s2 + $0x18] sm:$0xff]
    %vm66 = vcmask 261120
    %v68 = vsel %vm66, %v61, 0
    %70 = vmatpush.msra.mxu0 0.0
    %71 = vmatpush.msra.mxu0 0.0
    %72 = vmatpush.msra.mxu0 0.0
    %73 = vmatpush.msra.mxu0 0.0
    %74 = vmatpush.msra.mxu0 0.0
    %75 = vmatpush.msra.mxu0 0.0
    %76 = vmatpush.msra.mxu0 0.0
    %77 = vmatpush.msra.mxu0 0.0
    %78 = vmatpush.msra.mxu0 0.0
    %79 = vmatpush.msra.mxu0 0.0
    %80 = vmatpush.msra.mxu0 0.0
    %81 = vmatpush.msra.mxu0 0.0
    %82 = vmatpush.msra.mxu0 %v65
    %83 = vmatpush.msra.mxu0 %v64
    %84 = vmatpush.msra.mxu0 %v63
    %85 = vmatpush.msra.mxu0 %v62
    %86 = vmatmul.f32.gmra.mxu0 %v68
    %v87 = vpop.f32.mrf.mxu0
    %v88 = vadd.f32 0.0, %v87
    %89 = vdwg.mxu0
    %v90 = vld [vmem:[%s4] sm:$0xff]
    %v91 = vld [vmem:[%s4 + $0x8] sm:$0xff]
    %v92 = vld [vmem:[%s4 + $0x10] sm:$0xff]
    %v93 = vld [vmem:[%s4 + $0x18] sm:$0xff]
    %94 = vmatpush.msra.mxu0 0.0
    %95 = vmatpush.msra.mxu0 0.0
    %96 = vmatpush.msra.mxu0 0.0
    %97 = vmatpush.msra.mxu0 0.0
    %98 = vmatpush.msra.mxu0 0.0
    %99 = vmatpush.msra.mxu0 0.0
    %100 = vmatpush.msra.mxu0 0.0
    %101 = vmatpush.msra.mxu0 0.0
    %102 = vmatpush.msra.mxu0 0.0
    %103 = vmatpush.msra.mxu0 0.0
    %104 = vmatpush.msra.mxu0 0.0
    %105 = vmatpush.msra.mxu0 0.0
    %106 = vmatpush.msra.mxu0 %v93
    %107 = vmatpush.msra.mxu0 %v92
    %108 = vmatpush.msra.mxu0 %v91
    %109 = vmatpush.msra.mxu0 %v90
    %110 = vmatmul.f32.gmra.mxu0 %v68
    %v111 = vpop.f32.mrf.mxu0
    %v112 = vadd.f32 0.0, %v111
    %113 = vdwg.mxu0
    %v114 = vld [vmem:[#allocation5] sm:$0xff]
    %vm115 = vcmask 130048
    %v117 = vsel %vm115, %v114, 0
    %v120 = vsel %vm115, %v88, 0
    %122 = vmatpush.xpose.msra.mxu0 0.0
    %123 = vmatpush.xpose.msra.mxu0 0.0
    %124 = vmatpush.xpose.msra.mxu0 0.0
    %125 = vmatpush.xpose.msra.mxu0 0.0
    %126 = vmatpush.xpose.msra.mxu0 0.0
    %127 = vmatpush.xpose.msra.mxu0 0.0
    %128 = vmatpush.xpose.msra.mxu0 0.0
    %129 = vmatpush.xpose.msra.mxu0 0.0
    %130 = vmatpush.xpose.msra.mxu0 0.0
    %131 = vmatpush.xpose.msra.mxu0 0.0
    %132 = vmatpush.xpose.msra.mxu0 0.0
    %133 = vmatpush.xpose.msra.mxu0 0.0
    %134 = vmatpush.xpose.msra.mxu0 0.0
    %135 = vmatpush.xpose.msra.mxu0 0.0
    %136 = vmatpush.xpose.msra.mxu0 0.0
    %137 = vmatpush.xpose.msra.mxu0 %v120
    %138 = vmatmul.f32.gmra.mxu0 %v117
    %v139 = vpop.f32.mrf.mxu0
    %v140 = vadd.f32 0.0, %v139
    %141 = vdwg.mxu0
    %v142 = vld [vmem:[#allocation2] sm:$0xff]
    %vm143 = vcmask 64512
    %v144 = vsel %vm143, %v140, -inf
    %145 = vmax.xlane.f32.xlu0 %v144
    %v146 = vpop.xlane.xlu0 %145
    %v147 = vmax.f32 %v142, %v146
    %v148 = vsub.f32 %v142, %v147
    %v149 = vmul.f32 %v148, 1.442695
    %v150 = vpow.pop %v149
    %152 = vset.pattern.permute.xlu0 0
    %153 = vperm.xlu0 %152, %v147
    %v154 = vpop.permute.xlu0 %153
    %v156 = vsub.f32 %v140, %v154
    %v157 = vmul.f32 %v156, 1.442695
    %v158 = vpow.pop %v157
    %v159 = vld [vmem:[#allocation3] sm:$0xff]
    %v160 = vmul.f32 %v150, %v159
    %v161 = vsel %vm143, %v158, 0.0
    %162 = vadd.xlane.f32.xlu0 %v161
    %v163 = vpop.xlane.xlu0 %162
    %v164 = vadd.f32 %v160, %v163
    %vm165 = vcmask 7168
    %166 = vst.msk [vmem:[#allocation3] sm:$0xff] %vm165, %v164
    %v167 = vld [vmem:[#allocation4] sm:$0xff]
    %169 = vset.pattern.permute.xlu0 0
    %170 = vperm.xlu0 %169, %v150
    %v171 = vpop.permute.xlu0 %170
    %v173 = vmul.f32 %v171, %v167
    %v175 = vsel %vm143, %v158, 0
    %177 = vmatpush.msra.mxu0 0.0
    %178 = vmatpush.msra.mxu0 0.0
    %179 = vmatpush.msra.mxu0 0.0
    %180 = vmatpush.msra.mxu0 0.0
    %181 = vmatpush.msra.mxu0 0.0
    %182 = vmatpush.msra.mxu0 0.0
    %183 = vmatpush.msra.mxu0 0.0
    %184 = vmatpush.msra.mxu0 0.0
    %185 = vmatpush.msra.mxu0 0.0
    %186 = vmatpush.msra.mxu0 0.0
    %187 = vmatpush.msra.mxu0 0.0
    %188 = vmatpush.msra.mxu0 0.0
    %189 = vmatpush.msra.mxu0 0.0
    %190 = vmatpush.msra.mxu0 0.0
    %191 = vmatpush.msra.mxu0 0.0
    %192 = vmatpush.msra.mxu0 %v112
    %193 = vmatmul.f32.gmra.mxu0 %v175
    %v194 = vpop.f32.mrf.mxu0
    %v195 = vadd.f32 0.0, %v194
    %196 = vdwg.mxu0
    %v197 = vadd.f32 %v173, %v195
    %198 = vst.msk [vmem:[#allocation4] sm:$0xff] %vm115, %v197
    %199 = vst.msk [vmem:[#allocation2] sm:$0xff] %vm165, %v147
    // Predicated region
    $region26: #{tpu_custom_call.1} parent=1 // pred_check
      %p200 = pneg %p21
    $region27: #{tpu_custom_call.1} parent=1 // pred_check_branch
      %202 = sbr.rel (%p200) target = $region29
    $region28: #{tpu_custom_call.1} parent=1 // pred_region
      %v203 = vld [vmem:[#allocation3] sm:$0xff]
      %v204 = vrcp.pop %v203
      %v205 = vmul.f32 %v203, %v204
      %v206 = vsub.f32 1.0, %v205
      %v207 = vmul.f32 %v204, %v206
      %v208 = vadd.f32 %v204, %v207
      %vm209 = vweird.f32 %v203
      %vm210 = vweird.f32 %v204
      %vm211 = vmor %vm209, %vm210
      %v212 = vsel %vm211, %v204, %v208
      %v213 = vand.u32 2147483647, %v203
      %vm214 = vcmp.eq.f32.partialorder %v213, 8.507059e+37
      %v215 = vand.u32 %v203, 2147483648
      %v216 = vor.u32 1.1754944e-38, %v215
      %v217 = vsel %vm214, %v216, %v212
      %v218 = vld [vmem:[#allocation4] sm:$0xff]
      %220 = vset.pattern.permute.xlu0 0
      %221 = vperm.xlu0 %220, %v217
      %v222 = vpop.permute.xlu0 %221
      %v224 = vmul.f32 %v218, %v222
      %225 = vst.msk [vmem:[#allocation6] sm:$0xff] %vm115, %v224
    $region29: #{tpu_custom_call.1} parent=1 // pred_fallthru
      _
    // Predicated region
    $region30: #{tpu_custom_call.1} parent=1 // pred_check
      _
    $region31: #{tpu_custom_call.1} parent=1 // pred_check_branch
      %227 = sbr.rel (0) target = $region33
    $region32: #{tpu_custom_call.1} parent=1 // pred_region
      %229 = vsyncadd [#allocation7], 0
      %s231 = sshll.u32 [#allocation6], 4
      %s232 = int_to_ptr.vmem [resolvable:$true] %s231
      %s233 = sshll.u32 %s5, 4
      %s234 = int_to_ptr.hbm [resolvable:$true] %s233
      %236 = dma.vmem_to_hbm [thread:$0]  %s232, 128, %s234, [#allocation7]
    $region33: #{tpu_custom_call.1} parent=1 // pred_fallthru
      _
    // Predicated region
    $region34: #{tpu_custom_call.1} parent=1 // pred_check
      _
    $region35: #{tpu_custom_call.1} parent=1 // pred_check_branch
      %238 = sbr.rel (0) target = $region37
    $region36: #{tpu_custom_call.1} parent=1 // pred_region
      %240 = dma.done [#allocation7], 128
    $region37: #{tpu_custom_call.1} parent=1 // pred_fallthru
      _
    %241 = vsyncpa [#allocation7], 1

</llo_original>
